<compile_context>
chip_gen: v7x
topology: tpu7x:2x2x1
jax: 0.10.0
libtpu: 0.0.40
codegen_flags: <defaults>
</compile_context>

<pallas_src>
import functools

import jax
import jax.numpy as jnp
from jax import lax
from jax.experimental import pallas as pl
from jax.experimental.pallas import tpu as pltpu


def _round_up(x, m):
    return ((x + m - 1) // m) * m


# ----------------------------- kernel ---------------------------------------


def neumf_kernel(num_layers, u_gmf_ref, i_gmf_ref, mlp_in_ref, *rest):
    """One batch tile of the fused NeuMF forward.

    rest = (w0, b0, ..., w_{L-1}, b_{L-1},
            fc_w_gmf [1, gmf_dim], fc_w_mlp [1, mlp_dim], fc_b [1, 1],
            out_ref [1, TILE_B])
    """
    layer_refs = rest[: 2 * num_layers]
    fcg_ref, fcm_ref, fcb_ref, out_ref = rest[2 * num_layers:]

    # --- MLP tower.  The cat([u_mlp, i_mlp]) happens for free in the wrapper
    # gather, so layer 0 is a single K = 2*mlp_emb_dim matmul (half the MXU
    # pushes of a split formulation, and one fewer streamed input per step).
    x = mlp_in_ref[...]
    for layer in range(num_layers):
        w = layer_refs[2 * layer][...]          # [in, out]  (VMEM resident)
        b = layer_refs[2 * layer + 1][...]      # [1, out]
        x = jnp.maximum(
            jnp.dot(x, w, preferred_element_type=jnp.float32) + b, 0.0)

    # --- GMF branch: elementwise product (VPU).  f32 path; if embeddings are
    # ever stored in bf16, upcast here first (v5e VPU has no bf16 ALU path).
    gmf = u_gmf_ref[...] * i_gmf_ref[...]

    # --- Final FC as two (1, K) x (TILE_B, K)^T contractions.  Identical to
    # cat([gmf, x]) @ fc_w + fc_b, but (a) no lane-axis concat and (b) logits
    # come out lane-dense as (1, TILE_B) for an unmasked store/writeback.
    dn = (((1,), (1,)), ((), ()))
    logit = lax.dot_general(fcg_ref[...], gmf, dn,
                            preferred_element_type=jnp.float32)
    logit = logit + lax.dot_general(fcm_ref[...], x, dn,
                                    preferred_element_type=jnp.float32)
    logit = logit + fcb_ref[...]
    out_ref[...] = jax.nn.sigmoid(logit)


# ----------------------------- wrapper ---------------------------------------


def neumf_forward(u, i, params, num_layers, tile_b=2048):
    """NeuMF forward. u, i: int32 index vectors of shape [B]. Returns [B, 1]."""
    B = u.shape[0]
    b128 = _round_up(max(B, 1), 128)
    # Tile must be a multiple of 128 (lane-dense (1, TILE_B) output block);
    # don't over-tile tiny batches.
    tile_b = min(tile_b, b128)
    # v7x megacore: keep the grid at >= 2 points so the "parallel" batch axis
    # can shard across the 2 TensorCores.  Only when the batch actually spans
    # more than one lane tile -- a tiny batch stays a single tile.
    if b128 >= 256 and tile_b > b128 // 2:
        tile_b = _round_up(b128 // 2, 128)
    B_pad = _round_up(B, tile_b)
    if B_pad != B:
        pad = B_pad - B
        u = jnp.concatenate([u, jnp.zeros((pad,), u.dtype)])
        i = jnp.concatenate([i, jnp.zeros((pad,), i.dtype)])

    # Embedding lookups (JAX glue).  The u_mlp/i_mlp concat is done here so it
    # fuses with the gather -- no extra HBM traffic and one fewer kernel input.
    # TODO(synk): remove the gathered-activation HBM round trip entirely:
    # VMEM-resident tables + in-kernel gather when the tables (or a shard) fit,
    # or bf16-stored embeddings upcast in-kernel for HBM-scale tables.
    u_gmf = params["u_embed_gmf"][u]                       # [B_pad, gmf_dim]
    i_gmf = params["i_embed_gmf"][i]                       # [B_pad, gmf_dim]
    mlp_in = jnp.concatenate(
        [params["u_embed_mlp"][u], params["i_embed_mlp"][i]],
        axis=-1)                                           # [B_pad, 2*mlp_emb]

    gmf_dim = u_gmf.shape[1]
    mlp_in_dim = mlp_in.shape[1]

    # Split only the final FC weight so the kernel never concatenates along the
    # lane axis; the split matmuls are mathematically identical to the concat.
    fc_w = params["fc_w"]                                  # [gmf_dim + mlp_dim, 1]
    fc_w_gmf = fc_w[:gmf_dim].T                            # [1, gmf_dim]
    fc_w_mlp = fc_w[gmf_dim:].T                            # [1, mlp_dim]
    fc_b = params["fc_b"].reshape(1, 1)

    def tiled(feat):
        return pl.BlockSpec((tile_b, feat), lambda b: (b, 0))

    def resident(shape):
        return pl.BlockSpec(shape, lambda b: (0, 0))

    inputs = [u_gmf, i_gmf, mlp_in]
    in_specs = [tiled(gmf_dim), tiled(gmf_dim), tiled(mlp_in_dim)]

    for (w, b) in params["mlp_layers"]:
        inputs += [w, b.reshape(1, -1)]
        in_specs += [resident(w.shape), resident((1, b.shape[0]))]

    inputs += [fc_w_gmf, fc_w_mlp, fc_b]
    in_specs += [resident(fc_w_gmf.shape), resident(fc_w_mlp.shape),
                 resident((1, 1))]

    kernel = functools.partial(neumf_kernel, num_layers)

    out_row = pl.pallas_call(
        kernel,
        out_shape=jax.ShapeDtypeStruct((1, B_pad), jnp.float32),
        grid=(B_pad // tile_b,),
        in_specs=in_specs,
        out_specs=pl.BlockSpec((1, tile_b), lambda b: (0, b)),
        compiler_params=pltpu.CompilerParams(
            dimension_semantics=("parallel",),
            # Larger batch tiles (double-buffered input streams + the
            # (TILE_B, in_dim) MLP intermediates) need headroom above v5e's
            # 16 MiB scoped-VMEM default; well under physical VMEM everywhere.
            vmem_limit_bytes=64 * 1024 * 1024,
        ),
    )(*inputs)

    return out_row[0, :B].reshape(B, 1)


# ----------------------------- params ----------------------------------------


def init_params(key, n_user, n_item, gmf_dim, mlp_dim, num_layers):
    keys = jax.random.split(key, 6 + 2 * num_layers)
    mlp_emb_dim = mlp_dim * 2 ** (num_layers - 1)

    params = {
        "u_embed_gmf": 0.05 * jax.random.normal(keys[0], (n_user, gmf_dim), jnp.float32),
        "i_embed_gmf": 0.05 * jax.random.normal(keys[1], (n_item, gmf_dim), jnp.float32),
        "u_embed_mlp": 0.05 * jax.random.normal(keys[2], (n_user, mlp_emb_dim), jnp.float32),
        "i_embed_mlp": 0.05 * jax.random.normal(keys[3], (n_item, mlp_emb_dim), jnp.float32),
    }

    mlp_layers = []
    k_idx = 4
    for layer in range(num_layers):
        in_dim = mlp_dim * 2 ** (num_layers - layer)
        out_dim = in_dim // 2
        bound = 1.0 / jnp.sqrt(in_dim)
        w = jax.random.uniform(keys[k_idx], (in_dim, out_dim), jnp.float32, -bound, bound)
        b = jax.random.uniform(keys[k_idx + 1], (out_dim,), jnp.float32, -bound, bound)
        mlp_layers.append((w, b))
        k_idx += 2
    params["mlp_layers"] = mlp_layers

    fc_in = gmf_dim + mlp_dim
    bound = 1.0 / jnp.sqrt(fc_in)
    params["fc_w"] = jax.random.uniform(keys[k_idx], (fc_in, 1), jnp.float32, -bound, bound)
    params["fc_b"] = jax.random.uniform(keys[k_idx + 1], (1,), jnp.float32, -bound, bound)
    return params


# ----------------------------- reference (pure JAX) ---------------------------


def neumf_reference(u, i, params, num_layers):
    u_gmf = params["u_embed_gmf"][u]
    i_gmf = params["i_embed_gmf"][i]
    u_mlp = params["u_embed_mlp"][u]
    i_mlp = params["i_embed_mlp"][i]
    x = jnp.concatenate([u_mlp, i_mlp], axis=-1)
    for w, b in params["mlp_layers"]:
        x = jnp.maximum(x @ w + b, 0.0)
    gmf = u_gmf * i_gmf
    cat = jnp.concatenate([gmf, x], axis=-1)
    return jax.nn.sigmoid(cat @ params["fc_w"] + params["fc_b"])


# ----------------------------- main -------------------------------------------


if __name__ == "__main__":
    n_user, n_item = 32, 48
    gmf_dim, mlp_dim, num_layers = 16, 16, 3
    batch = 8

    key = jax.random.PRNGKey(0)
    pkey, ukey, ikey = jax.random.split(key, 3)
    params = init_params(pkey, n_user, n_item, gmf_dim, mlp_dim, num_layers)

    u = jax.random.randint(ukey, (batch,), 0, n_user, dtype=jnp.int32)
    i = jax.random.randint(ikey, (batch,), 0, n_item, dtype=jnp.int32)

    out = neumf_forward(u, i, params, num_layers)
    out = jax.block_until_ready(out)

    ref = neumf_reference(u, i, params, num_layers)
    assert out.shape == (batch, 1)
    assert jnp.allclose(out, ref, atol=1e-5, rtol=1e-5)

    print("KERNEL_OK")
</pallas_src>

<mosaic_0001>
module attributes {stable_mosaic.version = 11 : i64} {
  func.func @neumf_kernel(%arg0: i32, %arg1: memref<128x16xf32, #tpu.memory_space<vmem>>, %arg2: memref<128x16xf32, #tpu.memory_space<vmem>>, %arg3: memref<128x128xf32, #tpu.memory_space<vmem>>, %arg4: memref<128x64xf32, #tpu.memory_space<vmem>>, %arg5: memref<1x64xf32, #tpu.memory_space<vmem>>, %arg6: memref<64x32xf32, #tpu.memory_space<vmem>>, %arg7: memref<1x32xf32, #tpu.memory_space<vmem>>, %arg8: memref<32x16xf32, #tpu.memory_space<vmem>>, %arg9: memref<1x16xf32, #tpu.memory_space<vmem>>, %arg10: memref<1x16xf32, #tpu.memory_space<vmem>>, %arg11: memref<1x16xf32, #tpu.memory_space<vmem>>, %arg12: memref<1x1xf32, #tpu.memory_space<vmem>>, %arg13: memref<1x128xf32, #tpu.memory_space<vmem>>) attributes {dimension_semantics = [#tpu.dimension_semantics<parallel>], iteration_bounds = array<i64: 1>, scalar_prefetch = 0 : i64, scratch_operands = 0 : i64, tpu.core_type = #tpu.core_type<tc>, window_params = [{transform_indices = @transform_0, window_bounds = array<i64: 128, 16>}, {transform_indices = @transform_1, window_bounds = array<i64: 128, 16>}, {transform_indices = @transform_2, window_bounds = array<i64: 128, 128>}, {pipeline_mode = #tpu.pipeline_mode<synchronous>, transform_indices = @transform_3, window_bounds = array<i64: 128, 64>}, {pipeline_mode = #tpu.pipeline_mode<synchronous>, transform_indices = @transform_4, window_bounds = array<i64: 1, 64>}, {pipeline_mode = #tpu.pipeline_mode<synchronous>, transform_indices = @transform_5, window_bounds = array<i64: 64, 32>}, {pipeline_mode = #tpu.pipeline_mode<synchronous>, transform_indices = @transform_6, window_bounds = array<i64: 1, 32>}, {pipeline_mode = #tpu.pipeline_mode<synchronous>, transform_indices = @transform_7, window_bounds = array<i64: 32, 16>}, {pipeline_mode = #tpu.pipeline_mode<synchronous>, transform_indices = @transform_8, window_bounds = array<i64: 1, 16>}, {pipeline_mode = #tpu.pipeline_mode<synchronous>, transform_indices = @transform_9, window_bounds = array<i64: 1, 16>}, {pipeline_mode = #tpu.pipeline_mode<synchronous>, transform_indices = @transform_10, window_bounds = array<i64: 1, 16>}, {pipeline_mode = #tpu.pipeline_mode<synchronous>, transform_indices = @transform_11, window_bounds = array<i64: 1, 1>}, {transform_indices = @transform_12, window_bounds = array<i64: 1, 128>}]} {
    %c0 = arith.constant 0 : index
    %c0_0 = arith.constant 0 : index
    %0 = vector.load %arg3[%c0, %c0_0] : memref<128x128xf32, #tpu.memory_space<vmem>>, vector<128x128xf32>
    %c0_1 = arith.constant 0 : index
    %c0_2 = arith.constant 0 : index
    %1 = vector.load %arg4[%c0_1, %c0_2] : memref<128x64xf32, #tpu.memory_space<vmem>>, vector<128x64xf32>
    %c0_3 = arith.constant 0 : index
    %c0_4 = arith.constant 0 : index
    %2 = vector.load %arg5[%c0_3, %c0_4] : memref<1x64xf32, #tpu.memory_space<vmem>>, vector<1x64xf32>
    %cst = arith.constant dense<0.000000e+00> : vector<128x64xf32>
    %3 = tpu.matmul %0, %1, %cst {dimension_numbers = #tpu.dot_dimension_numbers<[1], [0], [0], [1], [0, 0, 1, 1], [], []>} : vector<128x128xf32>, vector<128x64xf32>, vector<128x64xf32> -> vector<128x64xf32>
    %4 = vector.broadcast %2 : vector<1x64xf32> to vector<128x64xf32>
    %5 = arith.addf %3, %4 : vector<128x64xf32>
    %cst_5 = arith.constant 0.000000e+00 : f32
    %6 = vector.broadcast %cst_5 : f32 to vector<128x64xf32>
    %7 = arith.maximumf %5, %6 : vector<128x64xf32>
    %c0_6 = arith.constant 0 : index
    %c0_7 = arith.constant 0 : index
    %8 = vector.load %arg6[%c0_6, %c0_7] : memref<64x32xf32, #tpu.memory_space<vmem>>, vector<64x32xf32>
    %c0_8 = arith.constant 0 : index
    %c0_9 = arith.constant 0 : index
    %9 = vector.load %arg7[%c0_8, %c0_9] : memref<1x32xf32, #tpu.memory_space<vmem>>, vector<1x32xf32>
    %cst_10 = arith.constant dense<0.000000e+00> : vector<128x32xf32>
    %10 = tpu.matmul %7, %8, %cst_10 {dimension_numbers = #tpu.dot_dimension_numbers<[1], [0], [0], [1], [0, 0, 1, 1], [], []>} : vector<128x64xf32>, vector<64x32xf32>, vector<128x32xf32> -> vector<128x32xf32>
    %11 = vector.broadcast %9 : vector<1x32xf32> to vector<128x32xf32>
    %12 = arith.addf %10, %11 : vector<128x32xf32>
    %cst_11 = arith.constant 0.000000e+00 : f32
    %13 = vector.broadcast %cst_11 : f32 to vector<128x32xf32>
    %14 = arith.maximumf %12, %13 : vector<128x32xf32>
    %c0_12 = arith.constant 0 : index
    %c0_13 = arith.constant 0 : index
    %15 = vector.load %arg8[%c0_12, %c0_13] : memref<32x16xf32, #tpu.memory_space<vmem>>, vector<32x16xf32>
    %c0_14 = arith.constant 0 : index
    %c0_15 = arith.constant 0 : index
    %16 = vector.load %arg9[%c0_14, %c0_15] : memref<1x16xf32, #tpu.memory_space<vmem>>, vector<1x16xf32>
    %cst_16 = arith.constant dense<0.000000e+00> : vector<128x16xf32>
    %17 = tpu.matmul %14, %15, %cst_16 {dimension_numbers = #tpu.dot_dimension_numbers<[1], [0], [0], [1], [0, 0, 1, 1], [], []>} : vector<128x32xf32>, vector<32x16xf32>, vector<128x16xf32> -> vector<128x16xf32>
    %18 = vector.broadcast %16 : vector<1x16xf32> to vector<128x16xf32>
    %19 = arith.addf %17, %18 : vector<128x16xf32>
    %cst_17 = arith.constant 0.000000e+00 : f32
    %20 = vector.broadcast %cst_17 : f32 to vector<128x16xf32>
    %21 = arith.maximumf %19, %20 : vector<128x16xf32>
    %c0_18 = arith.constant 0 : index
    %c0_19 = arith.constant 0 : index
    %22 = vector.load %arg1[%c0_18, %c0_19] : memref<128x16xf32, #tpu.memory_space<vmem>>, vector<128x16xf32>
    %c0_20 = arith.constant 0 : index
    %c0_21 = arith.constant 0 : index
    %23 = vector.load %arg2[%c0_20, %c0_21] : memref<128x16xf32, #tpu.memory_space<vmem>>, vector<128x16xf32>
    %24 = arith.mulf %22, %23 : vector<128x16xf32>
    %c0_22 = arith.constant 0 : index
    %c0_23 = arith.constant 0 : index
    %25 = vector.load %arg10[%c0_22, %c0_23] : memref<1x16xf32, #tpu.memory_space<vmem>>, vector<1x16xf32>
    %cst_24 = arith.constant dense<0.000000e+00> : vector<1x128xf32>
    %26 = tpu.matmul %25, %24, %cst_24 {dimension_numbers = #tpu.dot_dimension_numbers<[1], [1], [0], [0], [0, 0, 1, 0], [], []>} : vector<1x16xf32>, vector<128x16xf32>, vector<1x128xf32> -> vector<1x128xf32>
    %c0_25 = arith.constant 0 : index
    %c0_26 = arith.constant 0 : index
    %27 = vector.load %arg11[%c0_25, %c0_26] : memref<1x16xf32, #tpu.memory_space<vmem>>, vector<1x16xf32>
    %cst_27 = arith.constant dense<0.000000e+00> : vector<1x128xf32>
    %28 = tpu.matmul %27, %21, %cst_27 {dimension_numbers = #tpu.dot_dimension_numbers<[1], [1], [0], [0], [0, 0, 1, 0], [], []>} : vector<1x16xf32>, vector<128x16xf32>, vector<1x128xf32> -> vector<1x128xf32>
    %29 = arith.addf %26, %28 : vector<1x128xf32>
    %c0_28 = arith.constant 0 : index
    %c0_29 = arith.constant 0 : index
    %30 = vector.load %arg12[%c0_28, %c0_29] : memref<1x1xf32, #tpu.memory_space<vmem>>, vector<1x1xf32>
    %31 = vector.broadcast %30 : vector<1x1xf32> to vector<1x128xf32>
    %32 = arith.addf %29, %31 : vector<1x128xf32>
    %33 = arith.negf %32 : vector<1x128xf32>
    %34 = math.exp %33 : vector<1x128xf32>
    %cst_30 = arith.constant 1.000000e+00 : f32
    %35 = vector.broadcast %cst_30 : f32 to vector<1x128xf32>
    %36 = arith.addf %35, %34 : vector<1x128xf32>
    %37 = arith.divf %35, %36 : vector<1x128xf32>
    %c0_31 = arith.constant 0 : index
    %c0_32 = arith.constant 0 : index
    %38 = vector.load %arg13[%c0_31, %c0_32] : memref<1x128xf32, #tpu.memory_space<vmem>>, vector<1x128xf32>
    tpu.vector_store %arg13[%c0_31, %c0_32], %37 {strides = array<i32>} : memref<1x128xf32, #tpu.memory_space<vmem>>, vector<1x128xf32>,
    return
  }
  func.func @transform_0(%arg0: i32) -> (i32, i32) {
    %c0_i32 = arith.constant 0 : i32
    %c0_i32_0 = arith.constant 0 : i32
    return %arg0, %c0_i32 : i32, i32
  }
  func.func @transform_1(%arg0: i32) -> (i32, i32) {
    %c0_i32 = arith.constant 0 : i32
    %c0_i32_0 = arith.constant 0 : i32
    return %arg0, %c0_i32 : i32, i32
  }
  func.func @transform_2(%arg0: i32) -> (i32, i32) {
    %c0_i32 = arith.constant 0 : i32
    %c0_i32_0 = arith.constant 0 : i32
    return %arg0, %c0_i32 : i32, i32
  }
  func.func @transform_3(%arg0: i32) -> (i32, i32) {
    %c0_i32 = arith.constant 0 : i32
    %c0_i32_0 = arith.constant 0 : i32
    %c0_i32_1 = arith.constant 0 : i32
    return %c0_i32, %c0_i32_0 : i32, i32
  }
  func.func @transform_4(%arg0: i32) -> (i32, i32) {
    %c0_i32 = arith.constant 0 : i32
    %c0_i32_0 = arith.constant 0 : i32
    %c0_i32_1 = arith.constant 0 : i32
    return %c0_i32, %c0_i32_0 : i32, i32
  }
  func.func @transform_5(%arg0: i32) -> (i32, i32) {
    %c0_i32 = arith.constant 0 : i32
    %c0_i32_0 = arith.constant 0 : i32
    %c0_i32_1 = arith.constant 0 : i32
    return %c0_i32, %c0_i32_0 : i32, i32
  }
  func.func @transform_6(%arg0: i32) -> (i32, i32) {
    %c0_i32 = arith.constant 0 : i32
    %c0_i32_0 = arith.constant 0 : i32
    %c0_i32_1 = arith.constant 0 : i32
    return %c0_i32, %c0_i32_0 : i32, i32
  }
  func.func @transform_7(%arg0: i32) -> (i32, i32) {
    %c0_i32 = arith.constant 0 : i32
    %c0_i32_0 = arith.constant 0 : i32
    %c0_i32_1 = arith.constant 0 : i32
    return %c0_i32, %c0_i32_0 : i32, i32
  }
  func.func @transform_8(%arg0: i32) -> (i32, i32) {
    %c0_i32 = arith.constant 0 : i32
    %c0_i32_0 = arith.constant 0 : i32
    %c0_i32_1 = arith.constant 0 : i32
    return %c0_i32, %c0_i32_0 : i32, i32
  }
  func.func @transform_9(%arg0: i32) -> (i32, i32) {
    %c0_i32 = arith.constant 0 : i32
    %c0_i32_0 = arith.constant 0 : i32
    %c0_i32_1 = arith.constant 0 : i32
    return %c0_i32, %c0_i32_0 : i32, i32
  }
  func.func @transform_10(%arg0: i32) -> (i32, i32) {
    %c0_i32 = arith.constant 0 : i32
    %c0_i32_0 = arith.constant 0 : i32
    %c0_i32_1 = arith.constant 0 : i32
    return %c0_i32, %c0_i32_0 : i32, i32
  }
  func.func @transform_11(%arg0: i32) -> (i32, i32) {
    %c0_i32 = arith.constant 0 : i32
    %c0_i32_0 = arith.constant 0 : i32
    %c0_i32_1 = arith.constant 0 : i32
    return %c0_i32, %c0_i32_0 : i32, i32
  }
  func.func @transform_12(%arg0: i32) -> (i32, i32) {
    %c0_i32 = arith.constant 0 : i32
    %c0_i32_0 = arith.constant 0 : i32
    return %c0_i32, %arg0 : i32, i32
  }
}

</mosaic_0001>

<llo_original>
// kernel: tpu_custom_call.1
$region0: #{tpu_custom_call.1}
  #allocation0 [shape = 'u32[]', space=smem, size = 0x4, offset = 0x4, fixed_abs, tag = 'smem constant byte address 0x4 - core index']
  #allocation1 [shape = 'u32[144,128]{1,0:T(1,128)}', space=vmem, size = 0x12000, scoped, tag = 'internal scratch']
  #allocation2 [shape = 'f32[1,1]{1,0:T(1,128)S(1)}', space=vmem, size = 0x200, scoped, tag = 'scoped memory for tpu_custom_call.1']
  %s0 = inlined_call_operand.hbm [shape: f32[128,16], index: 0, kind: input, shape index: {}]
  %s1 = inlined_call_operand.hbm [shape: f32[128,16], index: 1, kind: input, shape index: {}]
  %s2 = inlined_call_operand.hbm [shape: f32[128,128], index: 2, kind: input, shape index: {}]
  %s3 = inlined_call_operand.hbm [shape: f32[128,64], index: 3, kind: input, shape index: {}]
  %s4 = inlined_call_operand.hbm [shape: f32[1,64], index: 4, kind: input, shape index: {}]
  %s5 = inlined_call_operand.hbm [shape: f32[64,32], index: 5, kind: input, shape index: {}]
  %s6 = inlined_call_operand.hbm [shape: f32[1,32], index: 6, kind: input, shape index: {}]
  %s7 = inlined_call_operand.hbm [shape: f32[32,16], index: 7, kind: input, shape index: {}]
  %s8 = inlined_call_operand.hbm [shape: f32[1,16], index: 8, kind: input, shape index: {}]
  %s9 = inlined_call_operand.hbm [shape: f32[1,16], index: 9, kind: input, shape index: {}]
  %s10 = inlined_call_operand.hbm [shape: f32[1,16], index: 10, kind: input, shape index: {}]
  %s11 = inlined_call_operand.<no memory space> [shape: f32[1,1], index: 11, kind: input, shape index: {}]
  %s12 = inlined_call_operand.hbm [shape: f32[1,128], index: 12, kind: output, shape index: {}]
  %s13 = sld [smem:[#allocation0]]
  $region102: #{tpu_custom_call.1} parent=0
    _
  %s15 = ssub.s32 1, %s13
  %s16 = scalar_select 0, %s15, %s13
  %v17 = vstv %s11
  %18 = vst [vmem:[#allocation2] sm:$0x1] %v17
  $region1: #{tpu_custom_call.1} parent=0
    #allocation3 [shape = 'u8[65536]{0}', space=vmem, size = 0x10000, scoped, tag = 'input window, operand 0, single buffered']
    #allocation4 [shape = 's32[1]{0}', space=sflag, size = 0x4, scoped, tag = 'scoped memory for tpu_custom_call.1']
    #allocation5 [shape = 's32[1]{0}', space=sflag, size = 0x4, scoped, tag = 'scoped memory for tpu_custom_call.1']
    #allocation6 [shape = 'u8[65536]{0}', space=vmem, size = 0x10000, scoped, tag = 'input window, operand 1, single buffered']
    #allocation7 [shape = 's32[1]{0}', space=sflag, size = 0x4, scoped, tag = 'scoped memory for tpu_custom_call.1']
    #allocation8 [shape = 'u8[65536]{0}', space=vmem, size = 0x10000, scoped, tag = 'input window, operand 2, single buffered']
    #allocation9 [shape = 'u8[65536]{0}', space=vmem, size = 0x10000, scoped, tag = 'input window, operand 3, single buffered']
    #allocation10 [shape = 's32[1]{0}', space=sflag, size = 0x4, scoped, tag = 'scoped memory for tpu_custom_call.1']
    #allocation11 [shape = 'u8[512]{0}', space=vmem, size = 0x400, scoped, tag = 'input window, operand 4, single buffered']
    #allocation12 [shape = 'u8[32768]{0}', space=vmem, size = 0x8000, scoped, tag = 'input window, operand 5, single buffered']
    #allocation13 [shape = 's32[1]{0}', space=sflag, size = 0x4, scoped, tag = 'scoped memory for tpu_custom_call.1']
    #allocation14 [shape = 'u8[512]{0}', space=vmem, size = 0x400, scoped, tag = 'input window, operand 6, single buffered']
    #allocation15 [shape = 'u8[16384]{0}', space=vmem, size = 0x4000, scoped, tag = 'input window, operand 7, single buffered']
    #allocation16 [shape = 's32[1]{0}', space=sflag, size = 0x4, scoped, tag = 'scoped memory for tpu_custom_call.1']
    #allocation17 [shape = 'u8[512]{0}', space=vmem, size = 0x400, scoped, tag = 'input window, operand 8, single buffered']
    #allocation18 [shape = 'u8[512]{0}', space=vmem, size = 0x400, scoped, tag = 'input window, operand 9, single buffered']
    #allocation19 [shape = 's32[1]{0}', space=sflag, size = 0x4, scoped, tag = 'scoped memory for tpu_custom_call.1']
    #allocation20 [shape = 'u8[512]{0}', space=vmem, size = 0x400, scoped, tag = 'input window, operand 10, single buffered']
    #allocation21 [shape = 'u8[512]{0}', space=vmem, size = 0x400, scoped, tag = 'output window, operand 0, single buffered']
    %19 = vsyncpa [#allocation4], 0
    %20 = vsyncpa [#allocation7], 0
    %21 = vsyncpa [#allocation10], 0
    %22 = vsyncpa [#allocation13], 0
    %23 = vsyncpa [#allocation16], 0
    %24 = vsyncpa [#allocation19], 0
    %25 = vsyncpa [#allocation5], 0
    // Predicated region
    $region2: #{tpu_custom_call.1} parent=1 // pred_check
      _
    $region3: #{tpu_custom_call.1} parent=1 // pred_check_branch
      %27 = sbr.rel (0) target = $region5
    $region4: #{tpu_custom_call.1} parent=1 // pred_region
      %s29 = ssub.s32 2048, 2048
      %30 = vsyncadd [#allocation4], %s29
      %s31 = sshll.u32 [#allocation3], 4
      %s32 = int_to_ptr.vmem [resolvable:$true] %s31
      %37 = dma.hbm_to_vmem [thread:$0]  %s0, 2048, %s32, [#allocation4], 128, 128, 8
    $region5: #{tpu_custom_call.1} parent=1 // pred_fallthru
      _
    // Predicated region
    $region6: #{tpu_custom_call.1} parent=1 // pred_check
      _
    $region7: #{tpu_custom_call.1} parent=1 // pred_check_branch
      %39 = sbr.rel (0) target = $region9
    $region8: #{tpu_custom_call.1} parent=1 // pred_region
      %s41 = ssub.s32 2048, 2048
      %42 = vsyncadd [#allocation7], %s41
      %s43 = sshll.u32 [#allocation6], 4
      %s44 = int_to_ptr.vmem [resolvable:$true] %s43
      %49 = dma.hbm_to_vmem [thread:$0]  %s1, 2048, %s44, [#allocation7], 128, 128, 8
    $region9: #{tpu_custom_call.1} parent=1 // pred_fallthru
      _
    // Predicated region
    $region10: #{tpu_custom_call.1} parent=1 // pred_check
      _
    $region11: #{tpu_custom_call.1} parent=1 // pred_check_branch
      %51 = sbr.rel (0) target = $region13
    $region12: #{tpu_custom_call.1} parent=1 // pred_region
      %s53 = ssub.s32 2048, 2048
      %54 = vsyncadd [#allocation7], %s53
      %s55 = sshll.u32 [#allocation8], 4
      %s56 = int_to_ptr.vmem [resolvable:$true] %s55
      %61 = dma.hbm_to_vmem [thread:$0]  %s2, 2048, %s56, [#allocation7], 128, 128, 8
    $region13: #{tpu_custom_call.1} parent=1 // pred_fallthru
      _
    // Predicated region
    $region14: #{tpu_custom_call.1} parent=1 // pred_check
      _
    $region15: #{tpu_custom_call.1} parent=1 // pred_check_branch
      %63 = sbr.rel (0) target = $region17
    $region16: #{tpu_custom_call.1} parent=1 // pred_region
      %s65 = ssub.s32 2048, 2048
      %66 = vsyncadd [#allocation10], %s65
      %s67 = sshll.u32 [#allocation9], 4
      %s68 = int_to_ptr.vmem [resolvable:$true] %s67
      %73 = dma.hbm_to_vmem [thread:$0]  %s3, 2048, %s68, [#allocation10], 128, 128, 8
    $region17: #{tpu_custom_call.1} parent=1 // pred_fallthru
      _
    // Predicated region
    $region18: #{tpu_custom_call.1} parent=1 // pred_check
      _
    $region19: #{tpu_custom_call.1} parent=1 // pred_check_branch
      %75 = sbr.rel (0) target = $region21
    $region20: #{tpu_custom_call.1} parent=1 // pred_region
      %s77 = ssub.s32 16, 16
      %78 = vsyncadd [#allocation10], %s77
      %s80 = sshll.u32 [#allocation11], 4
      %s81 = int_to_ptr.vmem [resolvable:$true] %s80
      %83 = dma.hbm_to_vmem [thread:$0]  %s4, 16, %s81, [#allocation10]
    $region21: #{tpu_custom_call.1} parent=1 // pred_fallthru
      _
    // Predicated region
    $region22: #{tpu_custom_call.1} parent=1 // pred_check
      _
    $region23: #{tpu_custom_call.1} parent=1 // pred_check_branch
      %85 = sbr.rel (0) target = $region25
    $region24: #{tpu_custom_call.1} parent=1 // pred_region
      %s87 = ssub.s32 1024, 1024
      %88 = vsyncadd [#allocation13], %s87
      %s89 = sshll.u32 [#allocation12], 4
      %s90 = int_to_ptr.vmem [resolvable:$true] %s89
      %95 = dma.hbm_to_vmem [thread:$0]  %s5, 1024, %s90, [#allocation13], 128, 128, 8
    $region25: #{tpu_custom_call.1} parent=1 // pred_fallthru
      _
    // Predicated region
    $region26: #{tpu_custom_call.1} parent=1 // pred_check
      _
    $region27: #{tpu_custom_call.1} parent=1 // pred_check_branch
      %97 = sbr.rel (0) target = $region29
    $region28: #{tpu_custom_call.1} parent=1 // pred_region
      %s99 = ssub.s32 16, 16
      %100 = vsyncadd [#allocation13], %s99
      %s102 = sshll.u32 [#allocation14], 4
      %s103 = int_to_ptr.vmem [resolvable:$true] %s102
      %105 = dma.hbm_to_vmem [thread:$0]  %s6, 16, %s103, [#allocation13]
    $region29: #{tpu_custom_call.1} parent=1 // pred_fallthru
      _
    // Predicated region
    $region30: #{tpu_custom_call.1} parent=1 // pred_check
      _
    $region31: #{tpu_custom_call.1} parent=1 // pred_check_branch
      %107 = sbr.rel (0) target = $region33
    $region32: #{tpu_custom_call.1} parent=1 // pred_region
      %s109 = ssub.s32 512, 512
      %110 = vsyncadd [#allocation16], %s109
      %s111 = sshll.u32 [#allocation15], 4
      %s112 = int_to_ptr.vmem [resolvable:$true] %s111
      %117 = dma.hbm_to_vmem [thread:$0]  %s7, 512, %s112, [#allocation16], 128, 128, 8
    $region33: #{tpu_custom_call.1} parent=1 // pred_fallthru
      _
    // Predicated region
    $region34: #{tpu_custom_call.1} parent=1 // pred_check
      _
    $region35: #{tpu_custom_call.1} parent=1 // pred_check_branch
      %119 = sbr.rel (0) target = $region37
    $region36: #{tpu_custom_call.1} parent=1 // pred_region
      %s121 = ssub.s32 16, 16
      %122 = vsyncadd [#allocation16], %s121
      %s124 = sshll.u32 [#allocation17], 4
      %s125 = int_to_ptr.vmem [resolvable:$true] %s124
      %127 = dma.hbm_to_vmem [thread:$0]  %s8, 16, %s125, [#allocation16]
    $region37: #{tpu_custom_call.1} parent=1 // pred_fallthru
      _
    // Predicated region
    $region38: #{tpu_custom_call.1} parent=1 // pred_check
      _
    $region39: #{tpu_custom_call.1} parent=1 // pred_check_branch
      %129 = sbr.rel (0) target = $region41
    $region40: #{tpu_custom_call.1} parent=1 // pred_region
      %s131 = ssub.s32 16, 16
      %132 = vsyncadd [#allocation19], %s131
      %s134 = sshll.u32 [#allocation18], 4
      %s135 = int_to_ptr.vmem [resolvable:$true] %s134
      %137 = dma.hbm_to_vmem [thread:$0]  %s9, 16, %s135, [#allocation19]
    $region41: #{tpu_custom_call.1} parent=1 // pred_fallthru
      _
    // Predicated region
    $region42: #{tpu_custom_call.1} parent=1 // pred_check
      _
    $region43: #{tpu_custom_call.1} parent=1 // pred_check_branch
      %139 = sbr.rel (0) target = $region45
    $region44: #{tpu_custom_call.1} parent=1 // pred_region
      %s141 = ssub.s32 16, 16
      %142 = vsyncadd [#allocation19], %s141
      %s144 = sshll.u32 [#allocation20], 4
      %s145 = int_to_ptr.vmem [resolvable:$true] %s144
      %147 = dma.hbm_to_vmem [thread:$0]  %s10, 16, %s145, [#allocation19]
    $region45: #{tpu_custom_call.1} parent=1 // pred_fallthru
      _
    // Predicated region
    $region46: #{tpu_custom_call.1} parent=1 // pred_check
      _
    $region47: #{tpu_custom_call.1} parent=1 // pred_check_branch
      %149 = sbr.rel (0) target = $region49
    $region48: #{tpu_custom_call.1} parent=1 // pred_region
      _
    $region49: #{tpu_custom_call.1} parent=1 // pred_fallthru
      _
    // Predicated region
    $region50: #{tpu_custom_call.1} parent=1 // pred_check
      _
    $region51: #{tpu_custom_call.1} parent=1 // pred_check_branch
      %151 = sbr.rel (0) target = $region53
    $region52: #{tpu_custom_call.1} parent=1 // pred_region
      %152 = dma.done [#allocation4], 2048
    $region53: #{tpu_custom_call.1} parent=1 // pred_fallthru
      _
    // Predicated region
    $region54: #{tpu_custom_call.1} parent=1 // pred_check
      _
    $region55: #{tpu_custom_call.1} parent=1 // pred_check_branch
      %154 = sbr.rel (0) target = $region57
    $region56: #{tpu_custom_call.1} parent=1 // pred_region
      %155 = dma.done [#allocation7], 2048
    $region57: #{tpu_custom_call.1} parent=1 // pred_fallthru
      _
    // Predicated region
    $region58: #{tpu_custom_call.1} parent=1 // pred_check
      _
    $region59: #{tpu_custom_call.1} parent=1 // pred_check_branch
      %157 = sbr.rel (0) target = $region61
    $region60: #{tpu_custom_call.1} parent=1 // pred_region
      %158 = dma.done [#allocation7], 2048
    $region61: #{tpu_custom_call.1} parent=1 // pred_fallthru
      _
    // Predicated region
    $region62: #{tpu_custom_call.1} parent=1 // pred_check
      _
    $region63: #{tpu_custom_call.1} parent=1 // pred_check_branch
      %160 = sbr.rel (0) target = $region65
    $region64: #{tpu_custom_call.1} parent=1 // pred_region
      %161 = dma.done [#allocation10], 2048
    $region65: #{tpu_custom_call.1} parent=1 // pred_fallthru
      _
    // Predicated region
    $region66: #{tpu_custom_call.1} parent=1 // pred_check
      _
    $region67: #{tpu_custom_call.1} parent=1 // pred_check_branch
      %163 = sbr.rel (0) target = $region69
    $region68: #{tpu_custom_call.1} parent=1 // pred_region
      %164 = dma.done [#allocation10], 16
    $region69: #{tpu_custom_call.1} parent=1 // pred_fallthru
      _
    // Predicated region
    $region70: #{tpu_custom_call.1} parent=1 // pred_check
      _
    $region71: #{tpu_custom_call.1} parent=1 // pred_check_branch
      %166 = sbr.rel (0) target = $region73
    $region72: #{tpu_custom_call.1} parent=1 // pred_region
      %167 = dma.done [#allocation13], 1024
    $region73: #{tpu_custom_call.1} parent=1 // pred_fallthru
      _
    // Predicated region
    $region74: #{tpu_custom_call.1} parent=1 // pred_check
      _
    $region75: #{tpu_custom_call.1} parent=1 // pred_check_branch
      %169 = sbr.rel (0) target = $region77
    $region76: #{tpu_custom_call.1} parent=1 // pred_region
      %170 = dma.done [#allocation13], 16
    $region77: #{tpu_custom_call.1} parent=1 // pred_fallthru
      _
    // Predicated region
    $region78: #{tpu_custom_call.1} parent=1 // pred_check
      _
    $region79: #{tpu_custom_call.1} parent=1 // pred_check_branch
      %172 = sbr.rel (0) target = $region81
    $region80: #{tpu_custom_call.1} parent=1 // pred_region
      %173 = dma.done [#allocation16], 512
    $region81: #{tpu_custom_call.1} parent=1 // pred_fallthru
      _
    // Predicated region
    $region82: #{tpu_custom_call.1} parent=1 // pred_check
      _
    $region83: #{tpu_custom_call.1} parent=1 // pred_check_branch
      %175 = sbr.rel (0) target = $region85
    $region84: #{tpu_custom_call.1} parent=1 // pred_region
      %176 = dma.done [#allocation16], 16
    $region85: #{tpu_custom_call.1} parent=1 // pred_fallthru
      _
    // Predicated region
    $region86: #{tpu_custom_call.1} parent=1 // pred_check
      _
    $region87: #{tpu_custom_call.1} parent=1 // pred_check_branch
      %178 = sbr.rel (0) target = $region89
    $region88: #{tpu_custom_call.1} parent=1 // pred_region
      %179 = dma.done [#allocation19], 16
    $region89: #{tpu_custom_call.1} parent=1 // pred_fallthru
      _
    // Predicated region
    $region90: #{tpu_custom_call.1} parent=1 // pred_check
      _
    $region91: #{tpu_custom_call.1} parent=1 // pred_check_branch
      %181 = sbr.rel (0) target = $region93
    $region92: #{tpu_custom_call.1} parent=1 // pred_region
      %182 = dma.done [#allocation19], 16
    $region93: #{tpu_custom_call.1} parent=1 // pred_fallthru
      _
    %v183 = vld [vmem:[#allocation8] sm:$0xff]
    %v184 = vld [vmem:[#allocation8 + $0x8] sm:$0xff]
    %v185 = vld [vmem:[#allocation8 + $0x10] sm:$0xff]
    %v186 = vld [vmem:[#allocation8 + $0x18] sm:$0xff]
    %v187 = vld [vmem:[#allocation8 + $0x20] sm:$0xff]
    %v188 = vld [vmem:[#allocation8 + $0x28] sm:$0xff]
    %v189 = vld [vmem:[#allocation8 + $0x30] sm:$0xff]
    %v190 = vld [vmem:[#allocation8 + $0x38] sm:$0xff]
    %v191 = vld [vmem:[#allocation8 + $0x40] sm:$0xff]
    %v192 = vld [vmem:[#allocation8 + $0x48] sm:$0xff]
    %v193 = vld [vmem:[#allocation8 + $0x50] sm:$0xff]
    %v194 = vld [vmem:[#allocation8 + $0x58] sm:$0xff]
    %v195 = vld [vmem:[#allocation8 + $0x60] sm:$0xff]
    %v196 = vld [vmem:[#allocation8 + $0x68] sm:$0xff]
    %v197 = vld [vmem:[#allocation8 + $0x70] sm:$0xff]
    %v198 = vld [vmem:[#allocation8 + $0x78] sm:$0xff]
    %v199 = vld [vmem:[#allocation9] sm:$0xff]
    %v200 = vld [vmem:[#allocation9 + $0x8] sm:$0xff]
    %v201 = vld [vmem:[#allocation9 + $0x10] sm:$0xff]
    %v202 = vld [vmem:[#allocation9 + $0x18] sm:$0xff]
    %v203 = vld [vmem:[#allocation9 + $0x20] sm:$0xff]
    %v204 = vld [vmem:[#allocation9 + $0x28] sm:$0xff]
    %v205 = vld [vmem:[#allocation9 + $0x30] sm:$0xff]
    %v206 = vld [vmem:[#allocation9 + $0x38] sm:$0xff]
    %v207 = vld [vmem:[#allocation9 + $0x40] sm:$0xff]
    %v208 = vld [vmem:[#allocation9 + $0x48] sm:$0xff]
    %v209 = vld [vmem:[#allocation9 + $0x50] sm:$0xff]
    %v210 = vld [vmem:[#allocation9 + $0x58] sm:$0xff]
    %v211 = vld [vmem:[#allocation9 + $0x60] sm:$0xff]
    %v212 = vld [vmem:[#allocation9 + $0x68] sm:$0xff]
    %v213 = vld [vmem:[#allocation9 + $0x70] sm:$0xff]
    %v214 = vld [vmem:[#allocation9 + $0x78] sm:$0xff]
    %v215 = vld [vmem:[#allocation11] sm:$0x1]
    %v217 = vlaneseq
    %v218 = vshrl.u32 %v217, 7
    %v219 = vsub.s32 0, %v218
    %v220 = vrot.slane %v215, %v219
    %222 = vmatprep.subr.mxu0 0.0
    %223 = vmatpush1.msra.mxu0 %v199
    %224 = vmatprep.subr.mxu0 0.0
    %225 = vmatpush1.msra.mxu0 %v200
    %226 = vmatprep.subr.mxu0 0.0
    %227 = vmatpush1.msra.mxu0 %v201
    %228 = vmatprep.subr.mxu0 0.0
    %229 = vmatpush1.msra.mxu0 %v202
    %230 = vmatprep.subr.mxu0 0.0
    %231 = vmatpush1.msra.mxu0 %v203
    %232 = vmatprep.subr.mxu0 0.0
    %233 = vmatpush1.msra.mxu0 %v204
    %234 = vmatprep.subr.mxu0 0.0
    %235 = vmatpush1.msra.mxu0 %v205
    %236 = vmatprep.subr.mxu0 0.0
    %237 = vmatpush1.msra.mxu0 %v206
    %238 = vmatprep.subr.mxu0 0.0
    %239 = vmatpush1.msra.mxu0 %v207
    %240 = vmatprep.subr.mxu0 0.0
    %241 = vmatpush1.msra.mxu0 %v208
    %242 = vmatprep.subr.mxu0 0.0
    %243 = vmatpush1.msra.mxu0 %v209
    %244 = vmatprep.subr.mxu0 0.0
    %245 = vmatpush1.msra.mxu0 %v210
    %246 = vmatprep.subr.mxu0 0.0
    %247 = vmatpush1.msra.mxu0 %v211
    %248 = vmatprep.subr.mxu0 0.0
    %249 = vmatpush1.msra.mxu0 %v212
    %250 = vmatprep.subr.mxu0 0.0
    %251 = vmatpush1.msra.mxu0 %v213
    %252 = vmatprep.subr.mxu0 0.0
    %253 = vmatpush1.msra.mxu0 %v214
    %254 = vmatprep.subr.mxu0 0.0
    %255 = vmatpush1.msra.mxu0 0.0
    %256 = vmatprep.subr.mxu0 0.0
    %257 = vmatpush1.msra.mxu0 0.0
    %258 = vmatprep.subr.mxu0 0.0
    %259 = vmatpush1.msra.mxu0 0.0
    %260 = vmatprep.subr.mxu0 0.0
    %261 = vmatpush1.msra.mxu0 0.0
    %262 = vmatprep.subr.mxu0 0.0
    %263 = vmatpush1.msra.mxu0 0.0
    %264 = vmatprep.subr.mxu0 0.0
    %265 = vmatpush1.msra.mxu0 0.0
    %266 = vmatprep.subr.mxu0 0.0
    %267 = vmatpush1.msra.mxu0 0.0
    %268 = vmatprep.subr.mxu0 0.0
    %269 = vmatpush1.msra.mxu0 0.0
    %270 = vmatprep.subr.mxu0 0.0
    %271 = vmatpush1.msra.mxu0 0.0
    %272 = vmatprep.subr.mxu0 0.0
    %273 = vmatpush1.msra.mxu0 0.0
    %274 = vmatprep.subr.mxu0 0.0
    %275 = vmatpush1.msra.mxu0 0.0
    %276 = vmatprep.subr.mxu0 0.0
    %277 = vmatpush1.msra.mxu0 0.0
    %278 = vmatprep.subr.mxu0 0.0
    %279 = vmatpush1.msra.mxu0 0.0
    %280 = vmatprep.subr.mxu0 0.0
    %281 = vmatpush1.msra.mxu0 0.0
    %282 = vmatprep.subr.mxu0 0.0
    %283 = vmatpush1.msra.mxu0 0.0
    %284 = vmatprep.subr.mxu0 0.0
    %285 = vmatpush1.msra.mxu0 0.0
    %286 = vmatprep.mubr.f32.mxu0 0.0
    %287 = vmatmul.mubr.f32.gmra.mrb[0].mxu0 %v183
    %v288 = vpop.f32.mrb[0].mxu0
    %v289 = vadd.f32 %v220, %v288
    %v290 = vpop.f32.mrb[0].mxu0
    %291 = vmatprep.mubr.f32.mxu0 0.0
    %292 = vmatmul.mubr.f32.gmra.mrb[0].mxu0 %v184
    %v293 = vpop.f32.mrb[0].mxu0
    %v294 = vadd.f32 %v220, %v293
    %v295 = vpop.f32.mrb[0].mxu0
    %296 = vmatprep.mubr.f32.mxu0 0.0
    %297 = vmatmul.mubr.f32.gmra.mrb[0].mxu0 %v185
    %v298 = vpop.f32.mrb[0].mxu0
    %v299 = vadd.f32 %v220, %v298
    %v300 = vpop.f32.mrb[0].mxu0
    %301 = vmatprep.mubr.f32.mxu0 0.0
    %302 = vmatmul.mubr.f32.gmra.mrb[0].mxu0 %v186
    %v303 = vpop.f32.mrb[0].mxu0
    %v304 = vadd.f32 %v220, %v303
    %v305 = vpop.f32.mrb[0].mxu0
    %306 = vmatprep.mubr.f32.mxu0 0.0
    %307 = vmatmul.mubr.f32.gmra.mrb[0].mxu0 %v187
    %v308 = vpop.f32.mrb[0].mxu0
    %v309 = vadd.f32 %v220, %v308
    %v310 = vpop.f32.mrb[0].mxu0
    %311 = vmatprep.mubr.f32.mxu0 0.0
    %312 = vmatmul.mubr.f32.gmra.mrb[0].mxu0 %v188
    %v313 = vpop.f32.mrb[0].mxu0
    %v314 = vadd.f32 %v220, %v313
    %v315 = vpop.f32.mrb[0].mxu0
    %316 = vmatprep.mubr.f32.mxu0 0.0
    %317 = vmatmul.mubr.f32.gmra.mrb[0].mxu0 %v189
    %v318 = vpop.f32.mrb[0].mxu0
    %v319 = vadd.f32 %v220, %v318
    %v320 = vpop.f32.mrb[0].mxu0
    %321 = vmatprep.mubr.f32.mxu0 0.0
    %322 = vmatmul.mubr.f32.gmra.mrb[0].mxu0 %v190
    %v323 = vpop.f32.mrb[0].mxu0
    %v324 = vadd.f32 %v220, %v323
    %v325 = vpop.f32.mrb[0].mxu0
    %326 = vmatprep.mubr.f32.mxu0 0.0
    %327 = vmatmul.mubr.f32.gmra.mrb[0].mxu0 %v191
    %v328 = vpop.f32.mrb[0].mxu0
    %v329 = vadd.f32 %v220, %v328
    %v330 = vpop.f32.mrb[0].mxu0
    %331 = vmatprep.mubr.f32.mxu0 0.0
    %332 = vmatmul.mubr.f32.gmra.mrb[0].mxu0 %v192
    %v333 = vpop.f32.mrb[0].mxu0
    %v334 = vadd.f32 %v220, %v333
    %v335 = vpop.f32.mrb[0].mxu0
    %336 = vmatprep.mubr.f32.mxu0 0.0
    %337 = vmatmul.mubr.f32.gmra.mrb[0].mxu0 %v193
    %v338 = vpop.f32.mrb[0].mxu0
    %v339 = vadd.f32 %v220, %v338
    %v340 = vpop.f32.mrb[0].mxu0
    %341 = vmatprep.mubr.f32.mxu0 0.0
    %342 = vmatmul.mubr.f32.gmra.mrb[0].mxu0 %v194
    %v343 = vpop.f32.mrb[0].mxu0
    %v344 = vadd.f32 %v220, %v343
    %v345 = vpop.f32.mrb[0].mxu0
    %346 = vmatprep.mubr.f32.mxu0 0.0
    %347 = vmatmul.mubr.f32.gmra.mrb[0].mxu0 %v195
    %v348 = vpop.f32.mrb[0].mxu0
    %v349 = vadd.f32 %v220, %v348
    %v350 = vpop.f32.mrb[0].mxu0
    %351 = vmatprep.mubr.f32.mxu0 0.0
    %352 = vmatmul.mubr.f32.gmra.mrb[0].mxu0 %v196
    %v353 = vpop.f32.mrb[0].mxu0
    %v354 = vadd.f32 %v220, %v353
    %v355 = vpop.f32.mrb[0].mxu0
    %356 = vmatprep.mubr.f32.mxu0 0.0
    %357 = vmatmul.mubr.f32.gmra.mrb[0].mxu0 %v197
    %v358 = vpop.f32.mrb[0].mxu0
    %v359 = vadd.f32 %v220, %v358
    %v360 = vpop.f32.mrb[0].mxu0
    %361 = vmatprep.mubr.f32.mxu0 0.0
    %362 = vmatmul.mubr.f32.gmra.mrb[0].mxu0 %v198
    %v363 = vpop.f32.mrb[0].mxu0
    %v364 = vadd.f32 %v220, %v363
    %v365 = vpop.f32.mrb[0].mxu0
    %366 = vdwg.mxu0
    %v367 = vmax.f32 %v289, 0.0
    %v368 = vmax.f32 %v294, 0.0
    %v369 = vmax.f32 %v299, 0.0
    %v370 = vmax.f32 %v304, 0.0
    %v371 = vmax.f32 %v309, 0.0
    %v372 = vmax.f32 %v314, 0.0
    %v373 = vmax.f32 %v319, 0.0
    %v374 = vmax.f32 %v324, 0.0
    %v375 = vmax.f32 %v329, 0.0
    %v376 = vmax.f32 %v334, 0.0
    %v377 = vmax.f32 %v339, 0.0
    %v378 = vmax.f32 %v344, 0.0
    %v379 = vmax.f32 %v349, 0.0
    %v380 = vmax.f32 %v354, 0.0
    %v381 = vmax.f32 %v359, 0.0
    %v382 = vmax.f32 %v364, 0.0
    %v383 = vld [vmem:[#allocation12] sm:$0xff]
    %v384 = vld [vmem:[#allocation12 + $0x8] sm:$0xff]
    %v385 = vld [vmem:[#allocation12 + $0x10] sm:$0xff]
    %v386 = vld [vmem:[#allocation12 + $0x18] sm:$0xff]
    %v387 = vld [vmem:[#allocation12 + $0x20] sm:$0xff]
    %v388 = vld [vmem:[#allocation12 + $0x28] sm:$0xff]
    %v389 = vld [vmem:[#allocation12 + $0x30] sm:$0xff]
    %v390 = vld [vmem:[#allocation12 + $0x38] sm:$0xff]
    %v391 = vld [vmem:[#allocation14] sm:$0x1]
    %v393 = vlaneseq
    %v394 = vshrl.u32 %v393, 7
    %v395 = vsub.s32 0, %v394
    %v396 = vrot.slane %v391, %v395
    %vm398 = vcmask 523264
    %v400 = vsel %vm398, %v367, 0
    %v403 = vsel %vm398, %v368, 0
    %v406 = vsel %vm398, %v369, 0
    %v409 = vsel %vm398, %v370, 0
    %v412 = vsel %vm398, %v371, 0
    %v415 = vsel %vm398, %v372, 0
    %v418 = vsel %vm398, %v373, 0
    %v421 = vsel %vm398, %v374, 0
    %v424 = vsel %vm398, %v375, 0
    %v427 = vsel %vm398, %v376, 0
    %v430 = vsel %vm398, %v377, 0
    %v433 = vsel %vm398, %v378, 0
    %v436 = vsel %vm398, %v379, 0
    %v439 = vsel %vm398, %v380, 0
    %v442 = vsel %vm398, %v381, 0
    %v445 = vsel %vm398, %v382, 0
    %447 = vmatprep.subr.mxu0 0.0
    %448 = vmatpush1.msra.mxu0 %v383
    %449 = vmatprep.subr.mxu0 0.0
    %450 = vmatpush1.msra.mxu0 %v384
    %451 = vmatprep.subr.mxu0 0.0
    %452 = vmatpush1.msra.mxu0 %v385
    %453 = vmatprep.subr.mxu0 0.0
    %454 = vmatpush1.msra.mxu0 %v386
    %455 = vmatprep.subr.mxu0 0.0
    %456 = vmatpush1.msra.mxu0 %v387
    %457 = vmatprep.subr.mxu0 0.0
    %458 = vmatpush1.msra.mxu0 %v388
    %459 = vmatprep.subr.mxu0 0.0
    %460 = vmatpush1.msra.mxu0 %v389
    %461 = vmatprep.subr.mxu0 0.0
    %462 = vmatpush1.msra.mxu0 %v390
    %463 = vmatprep.subr.mxu0 0.0
    %464 = vmatpush1.msra.mxu0 0.0
    %465 = vmatprep.subr.mxu0 0.0
    %466 = vmatpush1.msra.mxu0 0.0
    %467 = vmatprep.subr.mxu0 0.0
    %468 = vmatpush1.msra.mxu0 0.0
    %469 = vmatprep.subr.mxu0 0.0
    %470 = vmatpush1.msra.mxu0 0.0
    %471 = vmatprep.subr.mxu0 0.0
    %472 = vmatpush1.msra.mxu0 0.0
    %473 = vmatprep.subr.mxu0 0.0
    %474 = vmatpush1.msra.mxu0 0.0
    %475 = vmatprep.subr.mxu0 0.0
    %476 = vmatpush1.msra.mxu0 0.0
    %477 = vmatprep.subr.mxu0 0.0
    %478 = vmatpush1.msra.mxu0 0.0
    %479 = vmatprep.subr.mxu0 0.0
    %480 = vmatpush1.msra.mxu0 0.0
    %481 = vmatprep.subr.mxu0 0.0
    %482 = vmatpush1.msra.mxu0 0.0
    %483 = vmatprep.subr.mxu0 0.0
    %484 = vmatpush1.msra.mxu0 0.0
    %485 = vmatprep.subr.mxu0 0.0
    %486 = vmatpush1.msra.mxu0 0.0
    %487 = vmatprep.subr.mxu0 0.0
    %488 = vmatpush1.msra.mxu0 0.0
    %489 = vmatprep.subr.mxu0 0.0
    %490 = vmatpush1.msra.mxu0 0.0
    %491 = vmatprep.subr.mxu0 0.0
    %492 = vmatpush1.msra.mxu0 0.0
    %493 = vmatprep.subr.mxu0 0.0
    %494 = vmatpush1.msra.mxu0 0.0
    %495 = vmatprep.subr.mxu0 0.0
    %496 = vmatpush1.msra.mxu0 0.0
    %497 = vmatprep.subr.mxu0 0.0
    %498 = vmatpush1.msra.mxu0 0.0
    %499 = vmatprep.subr.mxu0 0.0
    %500 = vmatpush1.msra.mxu0 0.0
    %501 = vmatprep.subr.mxu0 0.0
    %502 = vmatpush1.msra.mxu0 0.0
    %503 = vmatprep.subr.mxu0 0.0
    %504 = vmatpush1.msra.mxu0 0.0
    %505 = vmatprep.subr.mxu0 0.0
    %506 = vmatpush1.msra.mxu0 0.0
    %507 = vmatprep.subr.mxu0 0.0
    %508 = vmatpush1.msra.mxu0 0.0
    %509 = vmatprep.subr.mxu0 0.0
    %510 = vmatpush1.msra.mxu0 0.0
    %511 = vmatprep.mubr.f32.mxu0 0.0
    %512 = vmatmul.mubr.f32.gmra.mrb[0].mxu0 %v400
    %v513 = vpop.f32.mrb[0].mxu0
    %v514 = vadd.f32 %v396, %v513
    %v515 = vpop.f32.mrb[0].mxu0
    %516 = vmatprep.mubr.f32.mxu0 0.0
    %517 = vmatmul.mubr.f32.gmra.mrb[0].mxu0 %v403
    %v518 = vpop.f32.mrb[0].mxu0
    %v519 = vadd.f32 %v396, %v518
    %v520 = vpop.f32.mrb[0].mxu0
    %521 = vmatprep.mubr.f32.mxu0 0.0
    %522 = vmatmul.mubr.f32.gmra.mrb[0].mxu0 %v406
    %v523 = vpop.f32.mrb[0].mxu0
    %v524 = vadd.f32 %v396, %v523
    %v525 = vpop.f32.mrb[0].mxu0
    %526 = vmatprep.mubr.f32.mxu0 0.0
    %527 = vmatmul.mubr.f32.gmra.mrb[0].mxu0 %v409
    %v528 = vpop.f32.mrb[0].mxu0
    %v529 = vadd.f32 %v396, %v528
    %v530 = vpop.f32.mrb[0].mxu0
    %531 = vmatprep.mubr.f32.mxu0 0.0
    %532 = vmatmul.mubr.f32.gmra.mrb[0].mxu0 %v412
    %v533 = vpop.f32.mrb[0].mxu0
    %v534 = vadd.f32 %v396, %v533
    %v535 = vpop.f32.mrb[0].mxu0
    %536 = vmatprep.mubr.f32.mxu0 0.0
    %537 = vmatmul.mubr.f32.gmra.mrb[0].mxu0 %v415
    %v538 = vpop.f32.mrb[0].mxu0
    %v539 = vadd.f32 %v396, %v538
    %v540 = vpop.f32.mrb[0].mxu0
    %541 = vmatprep.mubr.f32.mxu0 0.0
    %542 = vmatmul.mubr.f32.gmra.mrb[0].mxu0 %v418
    %v543 = vpop.f32.mrb[0].mxu0
    %v544 = vadd.f32 %v396, %v543
    %v545 = vpop.f32.mrb[0].mxu0
    %546 = vmatprep.mubr.f32.mxu0 0.0
    %547 = vmatmul.mubr.f32.gmra.mrb[0].mxu0 %v421
    %v548 = vpop.f32.mrb[0].mxu0
    %v549 = vadd.f32 %v396, %v548
    %v550 = vpop.f32.mrb[0].mxu0
    %551 = vmatprep.mubr.f32.mxu0 0.0
    %552 = vmatmul.mubr.f32.gmra.mrb[0].mxu0 %v424
    %v553 = vpop.f32.mrb[0].mxu0
    %v554 = vadd.f32 %v396, %v553
    %v555 = vpop.f32.mrb[0].mxu0
    %556 = vmatprep.mubr.f32.mxu0 0.0
    %557 = vmatmul.mubr.f32.gmra.mrb[0].mxu0 %v427
    %v558 = vpop.f32.mrb[0].mxu0
    %v559 = vadd.f32 %v396, %v558
    %v560 = vpop.f32.mrb[0].mxu0
    %561 = vmatprep.mubr.f32.mxu0 0.0
    %562 = vmatmul.mubr.f32.gmra.mrb[0].mxu0 %v430
    %v563 = vpop.f32.mrb[0].mxu0
    %v564 = vadd.f32 %v396, %v563
    %v565 = vpop.f32.mrb[0].mxu0
    %566 = vmatprep.mubr.f32.mxu0 0.0
    %567 = vmatmul.mubr.f32.gmra.mrb[0].mxu0 %v433
    %v568 = vpop.f32.mrb[0].mxu0
    %v569 = vadd.f32 %v396, %v568
    %v570 = vpop.f32.mrb[0].mxu0
    %571 = vmatprep.mubr.f32.mxu0 0.0
    %572 = vmatmul.mubr.f32.gmra.mrb[0].mxu0 %v436
    %v573 = vpop.f32.mrb[0].mxu0
    %v574 = vadd.f32 %v396, %v573
    %v575 = vpop.f32.mrb[0].mxu0
    %576 = vmatprep.mubr.f32.mxu0 0.0
    %577 = vmatmul.mubr.f32.gmra.mrb[0].mxu0 %v439
    %v578 = vpop.f32.mrb[0].mxu0
    %v579 = vadd.f32 %v396, %v578
    %v580 = vpop.f32.mrb[0].mxu0
    %581 = vmatprep.mubr.f32.mxu0 0.0
    %582 = vmatmul.mubr.f32.gmra.mrb[0].mxu0 %v442
    %v583 = vpop.f32.mrb[0].mxu0
    %v584 = vadd.f32 %v396, %v583
    %v585 = vpop.f32.mrb[0].mxu0
    %586 = vmatprep.mubr.f32.mxu0 0.0
    %587 = vmatmul.mubr.f32.gmra.mrb[0].mxu0 %v445
    %v588 = vpop.f32.mrb[0].mxu0
    %v589 = vadd.f32 %v396, %v588
    %v590 = vpop.f32.mrb[0].mxu0
    %591 = vdwg.mxu0
    %v592 = vmax.f32 %v514, 0.0
    %v593 = vmax.f32 %v519, 0.0
    %v594 = vmax.f32 %v524, 0.0
    %v595 = vmax.f32 %v529, 0.0
    %v596 = vmax.f32 %v534, 0.0
    %v597 = vmax.f32 %v539, 0.0
    %v598 = vmax.f32 %v544, 0.0
    %v599 = vmax.f32 %v549, 0.0
    %v600 = vmax.f32 %v554, 0.0
    %v601 = vmax.f32 %v559, 0.0
    %v602 = vmax.f32 %v564, 0.0
    %v603 = vmax.f32 %v569, 0.0
    %v604 = vmax.f32 %v574, 0.0
    %v605 = vmax.f32 %v579, 0.0
    %v606 = vmax.f32 %v584, 0.0
    %v607 = vmax.f32 %v589, 0.0
    %v608 = vld [vmem:[#allocation15] sm:$0xff]
    %v609 = vld [vmem:[#allocation15 + $0x8] sm:$0xff]
    %v610 = vld [vmem:[#allocation15 + $0x10] sm:$0xff]
    %v611 = vld [vmem:[#allocation15 + $0x18] sm:$0xff]
    %v612 = vld [vmem:[#allocation17] sm:$0x1]
    %v614 = vlaneseq
    %v615 = vshrl.u32 %v614, 7
    %v616 = vsub.s32 0, %v615
    %v617 = vrot.slane %v612, %v616
    %vm619 = vcmask 261120
    %v621 = vsel %vm619, %v592, 0
    %v624 = vsel %vm619, %v593, 0
    %v627 = vsel %vm619, %v594, 0
    %v630 = vsel %vm619, %v595, 0
    %v633 = vsel %vm619, %v596, 0
    %v636 = vsel %vm619, %v597, 0
    %v639 = vsel %vm619, %v598, 0
    %v642 = vsel %vm619, %v599, 0
    %v645 = vsel %vm619, %v600, 0
    %v648 = vsel %vm619, %v601, 0
    %v651 = vsel %vm619, %v602, 0
    %v654 = vsel %vm619, %v603, 0
    %v657 = vsel %vm619, %v604, 0
    %v660 = vsel %vm619, %v605, 0
    %v663 = vsel %vm619, %v606, 0
    %v666 = vsel %vm619, %v607, 0
    %668 = vmatprep.subr.mxu0 0.0
    %669 = vmatpush1.msra.mxu0 %v608
    %670 = vmatprep.subr.mxu0 0.0
    %671 = vmatpush1.msra.mxu0 %v609
    %672 = vmatprep.subr.mxu0 0.0
    %673 = vmatpush1.msra.mxu0 %v610
    %674 = vmatprep.subr.mxu0 0.0
    %675 = vmatpush1.msra.mxu0 %v611
    %676 = vmatprep.subr.mxu0 0.0
    %677 = vmatpush1.msra.mxu0 0.0
    %678 = vmatprep.subr.mxu0 0.0
    %679 = vmatpush1.msra.mxu0 0.0
    %680 = vmatprep.subr.mxu0 0.0
    %681 = vmatpush1.msra.mxu0 0.0
    %682 = vmatprep.subr.mxu0 0.0
    %683 = vmatpush1.msra.mxu0 0.0
    %684 = vmatprep.subr.mxu0 0.0
    %685 = vmatpush1.msra.mxu0 0.0
    %686 = vmatprep.subr.mxu0 0.0
    %687 = vmatpush1.msra.mxu0 0.0
    %688 = vmatprep.subr.mxu0 0.0
    %689 = vmatpush1.msra.mxu0 0.0
    %690 = vmatprep.subr.mxu0 0.0
    %691 = vmatpush1.msra.mxu0 0.0
    %692 = vmatprep.subr.mxu0 0.0
    %693 = vmatpush1.msra.mxu0 0.0
    %694 = vmatprep.subr.mxu0 0.0
    %695 = vmatpush1.msra.mxu0 0.0
    %696 = vmatprep.subr.mxu0 0.0
    %697 = vmatpush1.msra.mxu0 0.0
    %698 = vmatprep.subr.mxu0 0.0
    %699 = vmatpush1.msra.mxu0 0.0
    %700 = vmatprep.subr.mxu0 0.0
    %701 = vmatpush1.msra.mxu0 0.0
    %702 = vmatprep.subr.mxu0 0.0
    %703 = vmatpush1.msra.mxu0 0.0
    %704 = vmatprep.subr.mxu0 0.0
    %705 = vmatpush1.msra.mxu0 0.0
    %706 = vmatprep.subr.mxu0 0.0
    %707 = vmatpush1.msra.mxu0 0.0
    %708 = vmatprep.subr.mxu0 0.0
    %709 = vmatpush1.msra.mxu0 0.0
    %710 = vmatprep.subr.mxu0 0.0
    %711 = vmatpush1.msra.mxu0 0.0
    %712 = vmatprep.subr.mxu0 0.0
    %713 = vmatpush1.msra.mxu0 0.0
    %714 = vmatprep.subr.mxu0 0.0
    %715 = vmatpush1.msra.mxu0 0.0
    %716 = vmatprep.subr.mxu0 0.0
    %717 = vmatpush1.msra.mxu0 0.0
    %718 = vmatprep.subr.mxu0 0.0
    %719 = vmatpush1.msra.mxu0 0.0
    %720 = vmatprep.subr.mxu0 0.0
    %721 = vmatpush1.msra.mxu0 0.0
    %722 = vmatprep.subr.mxu0 0.0
    %723 = vmatpush1.msra.mxu0 0.0
    %724 = vmatprep.subr.mxu0 0.0
    %725 = vmatpush1.msra.mxu0 0.0
    %726 = vmatprep.subr.mxu0 0.0
    %727 = vmatpush1.msra.mxu0 0.0
    %728 = vmatprep.subr.mxu0 0.0
    %729 = vmatpush1.msra.mxu0 0.0
    %730 = vmatprep.subr.mxu0 0.0
    %731 = vmatpush1.msra.mxu0 0.0
    %732 = vmatprep.mubr.f32.mxu0 0.0
    %733 = vmatmul.mubr.f32.gmra.mrb[0].mxu0 %v621
    %v734 = vpop.f32.mrb[0].mxu0
    %v735 = vadd.f32 %v617, %v734
    %v736 = vpop.f32.mrb[0].mxu0
    %737 = vmatprep.mubr.f32.mxu0 0.0
    %738 = vmatmul.mubr.f32.gmra.mrb[0].mxu0 %v624
    %v739 = vpop.f32.mrb[0].mxu0
    %v740 = vadd.f32 %v617, %v739
    %v741 = vpop.f32.mrb[0].mxu0
    %742 = vmatprep.mubr.f32.mxu0 0.0
    %743 = vmatmul.mubr.f32.gmra.mrb[0].mxu0 %v627
    %v744 = vpop.f32.mrb[0].mxu0
    %v745 = vadd.f32 %v617, %v744
    %v746 = vpop.f32.mrb[0].mxu0
    %747 = vmatprep.mubr.f32.mxu0 0.0
    %748 = vmatmul.mubr.f32.gmra.mrb[0].mxu0 %v630
    %v749 = vpop.f32.mrb[0].mxu0
    %v750 = vadd.f32 %v617, %v749
    %v751 = vpop.f32.mrb[0].mxu0
    %752 = vmatprep.mubr.f32.mxu0 0.0
    %753 = vmatmul.mubr.f32.gmra.mrb[0].mxu0 %v633
    %v754 = vpop.f32.mrb[0].mxu0
    %v755 = vadd.f32 %v617, %v754
    %v756 = vpop.f32.mrb[0].mxu0
    %757 = vmatprep.mubr.f32.mxu0 0.0
    %758 = vmatmul.mubr.f32.gmra.mrb[0].mxu0 %v636
    %v759 = vpop.f32.mrb[0].mxu0
    %v760 = vadd.f32 %v617, %v759
    %v761 = vpop.f32.mrb[0].mxu0
    %762 = vmatprep.mubr.f32.mxu0 0.0
    %763 = vmatmul.mubr.f32.gmra.mrb[0].mxu0 %v639
    %v764 = vpop.f32.mrb[0].mxu0
    %v765 = vadd.f32 %v617, %v764
    %v766 = vpop.f32.mrb[0].mxu0
    %767 = vmatprep.mubr.f32.mxu0 0.0
    %768 = vmatmul.mubr.f32.gmra.mrb[0].mxu0 %v642
    %v769 = vpop.f32.mrb[0].mxu0
    %v770 = vadd.f32 %v617, %v769
    %v771 = vpop.f32.mrb[0].mxu0
    %772 = vmatprep.mubr.f32.mxu0 0.0
    %773 = vmatmul.mubr.f32.gmra.mrb[0].mxu0 %v645
    %v774 = vpop.f32.mrb[0].mxu0
    %v775 = vadd.f32 %v617, %v774
    %v776 = vpop.f32.mrb[0].mxu0
    %777 = vmatprep.mubr.f32.mxu0 0.0
    %778 = vmatmul.mubr.f32.gmra.mrb[0].mxu0 %v648
    %v779 = vpop.f32.mrb[0].mxu0
    %v780 = vadd.f32 %v617, %v779
    %v781 = vpop.f32.mrb[0].mxu0
    %782 = vmatprep.mubr.f32.mxu0 0.0
    %783 = vmatmul.mubr.f32.gmra.mrb[0].mxu0 %v651
    %v784 = vpop.f32.mrb[0].mxu0
    %v785 = vadd.f32 %v617, %v784
    %v786 = vpop.f32.mrb[0].mxu0
    %787 = vmatprep.mubr.f32.mxu0 0.0
    %788 = vmatmul.mubr.f32.gmra.mrb[0].mxu0 %v654
    %v789 = vpop.f32.mrb[0].mxu0
    %v790 = vadd.f32 %v617, %v789
    %v791 = vpop.f32.mrb[0].mxu0
    %792 = vmatprep.mubr.f32.mxu0 0.0
    %793 = vmatmul.mubr.f32.gmra.mrb[0].mxu0 %v657
    %v794 = vpop.f32.mrb[0].mxu0
    %v795 = vadd.f32 %v617, %v794
    %v796 = vpop.f32.mrb[0].mxu0
    %797 = vmatprep.mubr.f32.mxu0 0.0
    %798 = vmatmul.mubr.f32.gmra.mrb[0].mxu0 %v660
    %v799 = vpop.f32.mrb[0].mxu0
    %v800 = vadd.f32 %v617, %v799
    %v801 = vpop.f32.mrb[0].mxu0
    %802 = vmatprep.mubr.f32.mxu0 0.0
    %803 = vmatmul.mubr.f32.gmra.mrb[0].mxu0 %v663
    %v804 = vpop.f32.mrb[0].mxu0
    %v805 = vadd.f32 %v617, %v804
    %v806 = vpop.f32.mrb[0].mxu0
    %807 = vmatprep.mubr.f32.mxu0 0.0
    %808 = vmatmul.mubr.f32.gmra.mrb[0].mxu0 %v666
    %v809 = vpop.f32.mrb[0].mxu0
    %v810 = vadd.f32 %v617, %v809
    %v811 = vpop.f32.mrb[0].mxu0
    %812 = vdwg.mxu0
    %v813 = vmax.f32 %v735, 0.0
    %v814 = vmax.f32 %v740, 0.0
    %v815 = vmax.f32 %v745, 0.0
    %v816 = vmax.f32 %v750, 0.0
    %v817 = vmax.f32 %v755, 0.0
    %v818 = vmax.f32 %v760, 0.0
    %v819 = vmax.f32 %v765, 0.0
    %v820 = vmax.f32 %v770, 0.0
    %v821 = vmax.f32 %v775, 0.0
    %v822 = vmax.f32 %v780, 0.0
    %v823 = vmax.f32 %v785, 0.0
    %v824 = vmax.f32 %v790, 0.0
    %v825 = vmax.f32 %v795, 0.0
    %v826 = vmax.f32 %v800, 0.0
    %v827 = vmax.f32 %v805, 0.0
    %v828 = vmax.f32 %v810, 0.0
    %v829 = vld [vmem:[#allocation3] sm:$0xff]
    %v830 = vld [vmem:[#allocation3 + $0x8] sm:$0xff]
    %v831 = vld [vmem:[#allocation3 + $0x10] sm:$0xff]
    %v832 = vld [vmem:[#allocation3 + $0x18] sm:$0xff]
    %v833 = vld [vmem:[#allocation3 + $0x20] sm:$0xff]
    %v834 = vld [vmem:[#allocation3 + $0x28] sm:$0xff]
    %v835 = vld [vmem:[#allocation3 + $0x30] sm:$0xff]
    %v836 = vld [vmem:[#allocation3 + $0x38] sm:$0xff]
    %v837 = vld [vmem:[#allocation3 + $0x40] sm:$0xff]
    %v838 = vld [vmem:[#allocation3 + $0x48] sm:$0xff]
    %v839 = vld [vmem:[#allocation3 + $0x50] sm:$0xff]
    %v840 = vld [vmem:[#allocation3 + $0x58] sm:$0xff]
    %v841 = vld [vmem:[#allocation3 + $0x60] sm:$0xff]
    %v842 = vld [vmem:[#allocation3 + $0x68] sm:$0xff]
    %v843 = vld [vmem:[#allocation3 + $0x70] sm:$0xff]
    %v844 = vld [vmem:[#allocation3 + $0x78] sm:$0xff]
    %v845 = vld [vmem:[#allocation6] sm:$0xff]
    %v846 = vld [vmem:[#allocation6 + $0x8] sm:$0xff]
    %v847 = vld [vmem:[#allocation6 + $0x10] sm:$0xff]
    %v848 = vld [vmem:[#allocation6 + $0x18] sm:$0xff]
    %v849 = vld [vmem:[#allocation6 + $0x20] sm:$0xff]
    %v850 = vld [vmem:[#allocation6 + $0x28] sm:$0xff]
    %v851 = vld [vmem:[#allocation6 + $0x30] sm:$0xff]
    %v852 = vld [vmem:[#allocation6 + $0x38] sm:$0xff]
    %v853 = vld [vmem:[#allocation6 + $0x40] sm:$0xff]
    %v854 = vld [vmem:[#allocation6 + $0x48] sm:$0xff]
    %v855 = vld [vmem:[#allocation6 + $0x50] sm:$0xff]
    %v856 = vld [vmem:[#allocation6 + $0x58] sm:$0xff]
    %v857 = vld [vmem:[#allocation6 + $0x60] sm:$0xff]
    %v858 = vld [vmem:[#allocation6 + $0x68] sm:$0xff]
    %v859 = vld [vmem:[#allocation6 + $0x70] sm:$0xff]
    %v860 = vld [vmem:[#allocation6 + $0x78] sm:$0xff]
    %v861 = vmul.f32 %v829, %v845
    %v862 = vmul.f32 %v830, %v846
    %v863 = vmul.f32 %v831, %v847
    %v864 = vmul.f32 %v832, %v848
    %v865 = vmul.f32 %v833, %v849
    %v866 = vmul.f32 %v834, %v850
    %v867 = vmul.f32 %v835, %v851
    %v868 = vmul.f32 %v836, %v852
    %v869 = vmul.f32 %v837, %v853
    %v870 = vmul.f32 %v838, %v854
    %v871 = vmul.f32 %v839, %v855
    %v872 = vmul.f32 %v840, %v856
    %v873 = vmul.f32 %v841, %v857
    %v874 = vmul.f32 %v842, %v858
    %v875 = vmul.f32 %v843, %v859
    %v876 = vmul.f32 %v844, %v860
    %v877 = vld [vmem:[#allocation18] sm:$0x1]
    %v878 = vld [vmem:[#allocation20] sm:$0x1]
    %vm879 = vcmask 130048
    %v881 = vsel %vm879, %v878, 0
    %v884 = vsel %vm879, %v813, 0
    %v887 = vsel %vm879, %v814, 0
    %v890 = vsel %vm879, %v815, 0
    %v893 = vsel %vm879, %v816, 0
    %v896 = vsel %vm879, %v817, 0
    %v899 = vsel %vm879, %v818, 0
    %v902 = vsel %vm879, %v819, 0
    %v905 = vsel %vm879, %v820, 0
    %v908 = vsel %vm879, %v821, 0
    %v911 = vsel %vm879, %v822, 0
    %v914 = vsel %vm879, %v823, 0
    %v917 = vsel %vm879, %v824, 0
    %v920 = vsel %vm879, %v825, 0
    %v923 = vsel %vm879, %v826, 0
    %v926 = vsel %vm879, %v827, 0
    %v929 = vsel %vm879, %v828, 0
    %931 = vmatprep.subr.mxu0 0.0
    %932 = vmatpush1.xpose.msra.mxu0 %v884
    %933 = vmatprep.subr.mxu0 0.0
    %934 = vmatpush1.xpose.msra.mxu0 %v887
    %935 = vmatprep.subr.mxu0 0.0
    %936 = vmatpush1.xpose.msra.mxu0 %v890
    %937 = vmatprep.subr.mxu0 0.0
    %938 = vmatpush1.xpose.msra.mxu0 %v893
    %939 = vmatprep.subr.mxu0 0.0
    %940 = vmatpush1.xpose.msra.mxu0 %v896
    %941 = vmatprep.subr.mxu0 0.0
    %942 = vmatpush1.xpose.msra.mxu0 %v899
    %943 = vmatprep.subr.mxu0 0.0
    %944 = vmatpush1.xpose.msra.mxu0 %v902
    %945 = vmatprep.subr.mxu0 0.0
    %946 = vmatpush1.xpose.msra.mxu0 %v905
    %947 = vmatprep.subr.mxu0 0.0
    %948 = vmatpush1.xpose.msra.mxu0 %v908
    %949 = vmatprep.subr.mxu0 0.0
    %950 = vmatpush1.xpose.msra.mxu0 %v911
    %951 = vmatprep.subr.mxu0 0.0
    %952 = vmatpush1.xpose.msra.mxu0 %v914
    %953 = vmatprep.subr.mxu0 0.0
    %954 = vmatpush1.xpose.msra.mxu0 %v917
    %955 = vmatprep.subr.mxu0 0.0
    %956 = vmatpush1.xpose.msra.mxu0 %v920
    %957 = vmatprep.subr.mxu0 0.0
    %958 = vmatpush1.xpose.msra.mxu0 %v923
    %959 = vmatprep.subr.mxu0 0.0
    %960 = vmatpush1.xpose.msra.mxu0 %v926
    %961 = vmatprep.subr.mxu0 0.0
    %962 = vmatpush1.xpose.msra.mxu0 %v929
    %963 = vmatprep.subr.mxu0 0.0
    %964 = vmatpush1.xpose.msra.mxu0 0.0
    %965 = vmatprep.subr.mxu0 0.0
    %966 = vmatpush1.xpose.msra.mxu0 0.0
    %967 = vmatprep.subr.mxu0 0.0
    %968 = vmatpush1.xpose.msra.mxu0 0.0
    %969 = vmatprep.subr.mxu0 0.0
    %970 = vmatpush1.xpose.msra.mxu0 0.0
    %971 = vmatprep.subr.mxu0 0.0
    %972 = vmatpush1.xpose.msra.mxu0 0.0
    %973 = vmatprep.subr.mxu0 0.0
    %974 = vmatpush1.xpose.msra.mxu0 0.0
    %975 = vmatprep.subr.mxu0 0.0
    %976 = vmatpush1.xpose.msra.mxu0 0.0
    %977 = vmatprep.subr.mxu0 0.0
    %978 = vmatpush1.xpose.msra.mxu0 0.0
    %979 = vmatprep.subr.mxu0 0.0
    %980 = vmatpush1.xpose.msra.mxu0 0.0
    %981 = vmatprep.subr.mxu0 0.0
    %982 = vmatpush1.xpose.msra.mxu0 0.0
    %983 = vmatprep.subr.mxu0 0.0
    %984 = vmatpush1.xpose.msra.mxu0 0.0
    %985 = vmatprep.subr.mxu0 0.0
    %986 = vmatpush1.xpose.msra.mxu0 0.0
    %987 = vmatprep.subr.mxu0 0.0
    %988 = vmatpush1.xpose.msra.mxu0 0.0
    %989 = vmatprep.subr.mxu0 0.0
    %990 = vmatpush1.xpose.msra.mxu0 0.0
    %991 = vmatprep.subr.mxu0 0.0
    %992 = vmatpush1.xpose.msra.mxu0 0.0
    %993 = vmatprep.subr.mxu0 0.0
    %994 = vmatpush1.xpose.msra.mxu0 0.0
    %995 = vmatprep.mubr.f32.mxu0 0.0
    %996 = vmatmul.mubr.f32.gmra.mrb[0].mxu0 %v881
    %v997 = vpop.f32.mrb[0].mxu0
    %v998 = vadd.f32 0.0, %v997
    %v999 = vpop.f32.mrb[0].mxu0
    %1000 = vdwg.mxu0
    %v1002 = vsel %vm879, %v877, 0
    %v1005 = vsel %vm879, %v861, 0
    %v1008 = vsel %vm879, %v862, 0
    %v1011 = vsel %vm879, %v863, 0
    %v1014 = vsel %vm879, %v864, 0
    %v1017 = vsel %vm879, %v865, 0
    %v1020 = vsel %vm879, %v866, 0
    %v1023 = vsel %vm879, %v867, 0
    %v1026 = vsel %vm879, %v868, 0
    %v1029 = vsel %vm879, %v869, 0
    %v1032 = vsel %vm879, %v870, 0
    %v1035 = vsel %vm879, %v871, 0
    %v1038 = vsel %vm879, %v872, 0
    %v1041 = vsel %vm879, %v873, 0
    %v1044 = vsel %vm879, %v874, 0
    %v1047 = vsel %vm879, %v875, 0
    %v1050 = vsel %vm879, %v876, 0
    %1052 = vmatprep.subr.mxu0 0.0
    %1053 = vmatpush1.xpose.msra.mxu0 %v1005
    %1054 = vmatprep.subr.mxu0 0.0
    %1055 = vmatpush1.xpose.msra.mxu0 %v1008
    %1056 = vmatprep.subr.mxu0 0.0
    %1057 = vmatpush1.xpose.msra.mxu0 %v1011
    %1058 = vmatprep.subr.mxu0 0.0
    %1059 = vmatpush1.xpose.msra.mxu0 %v1014
    %1060 = vmatprep.subr.mxu0 0.0
    %1061 = vmatpush1.xpose.msra.mxu0 %v1017
    %1062 = vmatprep.subr.mxu0 0.0
    %1063 = vmatpush1.xpose.msra.mxu0 %v1020
    %1064 = vmatprep.subr.mxu0 0.0
    %1065 = vmatpush1.xpose.msra.mxu0 %v1023
    %1066 = vmatprep.subr.mxu0 0.0
    %1067 = vmatpush1.xpose.msra.mxu0 %v1026
    %1068 = vmatprep.subr.mxu0 0.0
    %1069 = vmatpush1.xpose.msra.mxu0 %v1029
    %1070 = vmatprep.subr.mxu0 0.0
    %1071 = vmatpush1.xpose.msra.mxu0 %v1032
    %1072 = vmatprep.subr.mxu0 0.0
    %1073 = vmatpush1.xpose.msra.mxu0 %v1035
    %1074 = vmatprep.subr.mxu0 0.0
    %1075 = vmatpush1.xpose.msra.mxu0 %v1038
    %1076 = vmatprep.subr.mxu0 0.0
    %1077 = vmatpush1.xpose.msra.mxu0 %v1041
    %1078 = vmatprep.subr.mxu0 0.0
    %1079 = vmatpush1.xpose.msra.mxu0 %v1044
    %1080 = vmatprep.subr.mxu0 0.0
    %1081 = vmatpush1.xpose.msra.mxu0 %v1047
    %1082 = vmatprep.subr.mxu0 0.0
    %1083 = vmatpush1.xpose.msra.mxu0 %v1050
    %1084 = vmatprep.subr.mxu0 0.0
    %1085 = vmatpush1.xpose.msra.mxu0 0.0
    %1086 = vmatprep.subr.mxu0 0.0
    %1087 = vmatpush1.xpose.msra.mxu0 0.0
    %1088 = vmatprep.subr.mxu0 0.0
    %1089 = vmatpush1.xpose.msra.mxu0 0.0
    %1090 = vmatprep.subr.mxu0 0.0
    %1091 = vmatpush1.xpose.msra.mxu0 0.0
    %1092 = vmatprep.subr.mxu0 0.0
    %1093 = vmatpush1.xpose.msra.mxu0 0.0
    %1094 = vmatprep.subr.mxu0 0.0
    %1095 = vmatpush1.xpose.msra.mxu0 0.0
    %1096 = vmatprep.subr.mxu0 0.0
    %1097 = vmatpush1.xpose.msra.mxu0 0.0
    %1098 = vmatprep.subr.mxu0 0.0
    %1099 = vmatpush1.xpose.msra.mxu0 0.0
    %1100 = vmatprep.subr.mxu0 0.0
    %1101 = vmatpush1.xpose.msra.mxu0 0.0
    %1102 = vmatprep.subr.mxu0 0.0
    %1103 = vmatpush1.xpose.msra.mxu0 0.0
    %1104 = vmatprep.subr.mxu0 0.0
    %1105 = vmatpush1.xpose.msra.mxu0 0.0
    %1106 = vmatprep.subr.mxu0 0.0
    %1107 = vmatpush1.xpose.msra.mxu0 0.0
    %1108 = vmatprep.subr.mxu0 0.0
    %1109 = vmatpush1.xpose.msra.mxu0 0.0
    %1110 = vmatprep.subr.mxu0 0.0
    %1111 = vmatpush1.xpose.msra.mxu0 0.0
    %1112 = vmatprep.subr.mxu0 0.0
    %1113 = vmatpush1.xpose.msra.mxu0 0.0
    %1114 = vmatprep.subr.mxu0 0.0
    %1115 = vmatpush1.xpose.msra.mxu0 0.0
    %1116 = vmatprep.mubr.f32.mxu0 0.0
    %1117 = vmatmul.mubr.f32.gmra.mrb[0].mxu0 %v1002
    %v1118 = vpop.f32.mrb[0].mxu0
    %v1119 = vadd.f32 %v998, %v1118
    %v1120 = vpop.f32.mrb[0].mxu0
    %1121 = vdwg.mxu0
    %v1122 = vld [vmem:[#allocation2] sm:$0x1]
    %1124 = vset.pattern.permute.xlu0 0
    %1125 = vperm.xlu0 %1124, %v1122
    %v1126 = vpop.permute.xlu0 %1125
    %v1128 = vlaneseq
    %v1129 = vshrl.u32 %v1128, 7
    %v1130 = vsub.s32 0, %v1129
    %v1131 = vrot.slane %v1126, %v1130
    %v1132 = vadd.f32 %v1119, %v1131
    %v1133 = vxor.u32 %v1132, 2147483648
    %v1134 = vmul.f32 %v1133, 1.442695
    %v1135 = vpow.pop %v1134
    %v1136 = vadd.f32 %v1135, 1.0
    %v1137 = vrcp.pop %v1136
    %v1138 = vmul.f32 1.0, %v1137
    %1139 = vst [vmem:[#allocation21] sm:$0x1] %v1138
    // Predicated region
    $region94: #{tpu_custom_call.1} parent=1 // pred_check
      _
    $region95: #{tpu_custom_call.1} parent=1 // pred_check_branch
      %1141 = sbr.rel (0) target = $region97
    $region96: #{tpu_custom_call.1} parent=1 // pred_region
      %s1143 = ssub.s32 16, 16
      %1144 = vsyncadd [#allocation5], %s1143
      %s1146 = sshll.u32 [#allocation21], 4
      %s1147 = int_to_ptr.vmem [resolvable:$true] %s1146
      %1149 = dma.vmem_to_hbm [thread:$0]  %s1147, 16, %s12, [#allocation5]
    $region97: #{tpu_custom_call.1} parent=1 // pred_fallthru
      _
    // Predicated region
    $region98: #{tpu_custom_call.1} parent=1 // pred_check
      _
    $region99: #{tpu_custom_call.1} parent=1 // pred_check_branch
      %1151 = sbr.rel (0) target = $region101
    $region100: #{tpu_custom_call.1} parent=1 // pred_region
      %1152 = dma.done [#allocation5], 16
    $region101: #{tpu_custom_call.1} parent=1 // pred_fallthru
      _
    %1153 = vsyncpa [#allocation4], 1
    %1154 = vsyncpa [#allocation7], 1
    %1155 = vsyncpa [#allocation10], 1
    %1156 = vsyncpa [#allocation13], 1
    %1157 = vsyncpa [#allocation16], 1
    %1158 = vsyncpa [#allocation19], 1
    %1159 = vsyncpa [#allocation5], 1

</llo_original>
